<compile_context>
chip_gen: v7x
topology: tpu7x:2x2x1
jax: 0.10.0
libtpu: 0.0.40
codegen_flags: <defaults>
</compile_context>

<pallas_src>
import functools

import jax
import jax.numpy as jnp
from jax.experimental import pallas as pl
from jax.experimental.pallas import tpu as pltpu

_MiB = 1024 * 1024


def _round_up(x, m):
    return ((x + m - 1) // m) * m


def _pick_tile(dim, cap, step):
    """Largest multiple of `step` that divides `dim` and is <= cap (dim % step == 0)."""
    t = min(cap, dim)
    t = (t // step) * step
    while dim % t != 0:
        t -= step
    return t


def _row_step(dtype):
    # bf16 packs 2 rows per sublane -> keep row tiles 16-aligned; f32 -> 8.
    return 16 if jnp.dtype(dtype).itemsize == 2 else 8


# ---------------------------------------------------------------------------
# Path 1: fused lane-dense kernel (small / non-128-multiple D).
# One MXU matmul covers all branches; output is one lane-dense slab.
# ---------------------------------------------------------------------------
def _fused_kernel(x_ref, w_ref, b_ref, o_ref):
    # x_ref: (tm, H)   w_ref: (H, Wp)   b_ref: (1, Wp)   o_ref: (tm, Wp)
    y = jnp.dot(x_ref[...], w_ref[...], preferred_element_type=jnp.float32)
    o_ref[...] = (y + b_ref[...]).astype(o_ref.dtype)


def _fused_vmem_bytes(tm, H, wp, x_bytes, out_bytes):
    # double-buffered x, w, b + double-buffered output slab
    return (2 * tm * H * x_bytes + 2 * H * wp * x_bytes
            + 2 * wp * 4 + 2 * tm * wp * out_bytes)


def _fused_parallel_linear(x2, weights, biases, out_dtype, tm_cap):
    M, H = x2.shape
    N, _, D = weights.shape
    xb = jnp.dtype(x2.dtype).itemsize
    ob = jnp.dtype(out_dtype).itemsize
    step = _row_step(x2.dtype)

    nd = N * D
    wp = _round_up(nd, 128)           # lane-dense output width (multiple of 128)

    # Biggest tm (<= cap, multiple of row step) that keeps the pipeline in budget.
    tm = min(_round_up(tm_cap, step), max(step, _round_up(M, step)))
    while _fused_vmem_bytes(tm, H, wp, xb, ob) > 40 * _MiB and tm > step:
        tm = max(step, (tm // 2 // step) * step)
    Mp = _round_up(M, tm)
    if Mp != M:
        x2 = jnp.pad(x2, ((0, Mp - M), (0, 0)))

    # (N, H, D) -> (H, N*D): W_cat[:, i*D:(i+1)*D] == weights[i]
    w_cat = jnp.transpose(weights, (1, 0, 2)).reshape(H, nd)
    b_cat = biases.reshape(1, nd).astype(jnp.float32)
    if wp != nd:
        w_cat = jnp.pad(w_cat, ((0, 0), (0, wp - nd)))
        b_cat = jnp.pad(b_cat, ((0, 0), (0, wp - nd)))

    vmem_limit = int(min(56 * _MiB,
                         max(32 * _MiB,
                             _fused_vmem_bytes(tm, H, wp, xb, ob) + 8 * _MiB)))

    slab = pl.pallas_call(
        _fused_kernel,
        out_shape=jax.ShapeDtypeStruct((Mp, wp), out_dtype),
        grid_spec=pltpu.PrefetchScalarGridSpec(
            num_scalar_prefetch=0,
            grid=(Mp // tm,),
            in_specs=[
                pl.BlockSpec((tm, H), lambda m: (m, 0)),    # x tile
                pl.BlockSpec((H, wp), lambda m: (0, 0)),    # fused weights (resident)
                pl.BlockSpec((1, wp), lambda m: (0, 0)),    # fused bias (resident)
            ],
            # Single lane-dense output slab -> unmasked full-lane stores.
            out_specs=pl.BlockSpec((tm, wp), lambda m: (m, 0)),
        ),
        compiler_params=pltpu.CompilerParams(
            dimension_semantics=("parallel",),
            vmem_limit_bytes=vmem_limit,
        ),
    )(x2, w_cat, b_cat)
    return slab, Mp


# ---------------------------------------------------------------------------
# Path 2: tiled kernel for H, D multiples of 128 (realistic hidden sizes).
# Grid = (M_tiles, D_tiles, K_tiles); each x tile is reused by all N branches.
# ---------------------------------------------------------------------------
def _make_tiled_kernel(n_branches):
    def kernel(x_ref, w_ref, b_ref, *rest):
        # x_ref: (tm, tk)  w_ref: (N, tk, tn)  b_ref: (N, 1, tn)
        # rest: N output refs (tm, tn) + f32 acc scratch (N, tm, tn)
        out_refs = rest[:n_branches]
        acc_ref = rest[n_branches]
        k = pl.program_id(2)

        @pl.when(k == 0)
        def _init():
            acc_ref[...] = jnp.zeros_like(acc_ref)

        x = x_ref[...]                      # one x load, shared by all branches
        for i in range(n_branches):
            acc_ref[i] += jnp.dot(x, w_ref[i], preferred_element_type=jnp.float32)

        @pl.when(k == pl.num_programs(2) - 1)
        def _finalize():
            for i in range(n_branches):
                out_refs[i][...] = (acc_ref[i] + b_ref[i]).astype(out_refs[i].dtype)

    return kernel


def _tiled_vmem_bytes(tm, tn, tk, n, x_bytes, out_bytes):
    x_buf = 2 * tm * tk * x_bytes              # double-buffered x tile
    w_buf = 2 * n * tk * tn * x_bytes          # double-buffered N weight tiles
    b_buf = 2 * n * tn * 4                     # biases (f32)
    o_buf = 2 * n * tm * tn * out_bytes        # N output blocks
    acc = n * tm * tn * 4                      # N f32 accumulators
    return x_buf + w_buf + b_buf + o_buf + acc


def _tiled_parallel_linear(x2, weights, biases, out_dtype, tm_cap, tn_cap, tk_cap):
    M, H = x2.shape
    N, _, D = weights.shape
    xb = jnp.dtype(x2.dtype).itemsize
    ob = jnp.dtype(out_dtype).itemsize
    step = _row_step(x2.dtype)

    tn = _pick_tile(D, tn_cap, 128)
    tk = _pick_tile(H, tk_cap, 128)
    tm = min(_round_up(tm_cap, step), max(step, _round_up(M, step)))
    # Keep the whole pipeline within a budget that fits every generation
    # (v7x: 32 MiB scoped / 64 MiB physical; v5e/v6e: 128 MiB).
    while _tiled_vmem_bytes(tm, tn, tk, N, xb, ob) > 40 * _MiB and tm > step:
        tm = max(step, (tm // 2 // step) * step)
    while _tiled_vmem_bytes(tm, tn, tk, N, xb, ob) > 40 * _MiB and tn > 128:
        tn = _pick_tile(D, max(128, tn // 2), 128)

    Mp = _round_up(M, tm)                      # pad to the chosen tile, not to 8
    if Mp != M:
        x2 = jnp.pad(x2, ((0, Mp - M), (0, 0)))

    b3 = biases.reshape(N, 1, D).astype(jnp.float32)
    vmem_limit = int(min(56 * _MiB,
                         max(32 * _MiB,
                             _tiled_vmem_bytes(tm, tn, tk, N, xb, ob) + 8 * _MiB)))

    kernel = _make_tiled_kernel(N)
    out_shape = tuple(jax.ShapeDtypeStruct((Mp, D), out_dtype) for _ in range(N))

    outs = pl.pallas_call(
        kernel,
        out_shape=out_shape,
        grid_spec=pltpu.PrefetchScalarGridSpec(
            num_scalar_prefetch=0,
            grid=(Mp // tm, D // tn, H // tk),
            in_specs=[
                # x tile: DMA'd once per (m, j, k); reused for all N branches.
                pl.BlockSpec((tm, tk), lambda m, j, k: (m, k)),
                # all N branches' weight tiles in a single block
                pl.BlockSpec((N, tk, tn), lambda m, j, k: (0, k, j)),
                # all N bias tiles
                pl.BlockSpec((N, 1, tn), lambda m, j, k: (0, 0, j)),
            ],
            out_specs=tuple(
                pl.BlockSpec((tm, tn), lambda m, j, k: (m, j)) for _ in range(N)
            ),
            scratch_shapes=[pltpu.VMEM((N, tm, tn), jnp.float32)],
        ),
        compiler_params=pltpu.CompilerParams(
            # Megacore (v7x) shards the balanced M/D tile axes; K is the reduction.
            dimension_semantics=("parallel", "parallel", "arbitrary"),
            vmem_limit_bytes=vmem_limit,
        ),
    )(x2, weights, b3)
    return outs, Mp


# ---------------------------------------------------------------------------
# Public wrapper: mirrors Parallel(Linear, ..., Linear).forward(x) -> list
# ---------------------------------------------------------------------------
@functools.partial(jax.jit,
                   static_argnames=("tm", "tn", "tk", "fused_tm", "compute_dtype"))
def parallel_linear(x, weights, biases, *, tm=1024, tn=512, tk=512, fused_tm=2048,
                    compute_dtype=jnp.bfloat16):
    """Fused Parallel(Linear, ...) forward.

    x:       (B, S, H)
    weights: (N, H, D)   (out_i = x @ weights[i] + biases[i])
    biases:  (N, D)
    returns: list of N arrays, each (B, S, D)

    compute_dtype: dtype fed to the MXU (default bf16; accumulation stays f32
    via preferred_element_type).  Pass jnp.float32 for exact f32 matmuls.
    # TODO(synk): on v7x, quantized weights should use fp8 (no int MXU path);
    # int8 only applies to v5e/v6e and is not implemented here.
    """
    B, S, H = x.shape
    N, H_in, D = weights.shape
    assert H_in == H, "weight contraction dim must match hidden size"
    M = B * S
    out_dtype = x.dtype

    x2 = x.reshape(M, H)                       # contiguous -> free reshape
    w = weights
    if compute_dtype is not None:
        cd = jnp.dtype(compute_dtype)
        if x2.dtype != cd:
            x2 = x2.astype(cd)
        if w.dtype != cd:
            w = w.astype(cd)

    results = []
    if H % 128 == 0 and D % 128 == 0:
        outs, Mp = _tiled_parallel_linear(x2, w, biases, out_dtype, tm, tn, tk)
        for o in outs:
            if Mp != M:
                o = o[:M]                      # only copies when M was padded
            results.append(o.reshape(B, S, D))
    else:
        # Small / ragged feature dims: all branches in one lane-dense matmul and
        # one wide output slab; branch column slices taken here (cheap for tiny D).
        slab, Mp = _fused_parallel_linear(x2, w, biases, out_dtype, fused_tm)
        for i in range(N):
            o = slab[:M, i * D:(i + 1) * D]
            results.append(o.reshape(B, S, D))
    # Return a Python list, mirroring `return [fn(x) for fn in self.fns]`.
    return results


if __name__ == "__main__":
    key = jax.random.PRNGKey(0)
    N_BRANCHES = 3

    # --- Test 1: tiny demo shapes (fused lane-dense path, H = 32 < 128) -----
    B, S, H = 2, 8, 32
    kx, kw, kb, key = jax.random.split(key, 4)
    x = jax.random.normal(kx, (B, S, H), dtype=jnp.float32)
    weights = 0.05 * jax.random.normal(kw, (N_BRANCHES, H, H), dtype=jnp.float32)
    biases = 0.01 * jax.random.normal(kb, (N_BRANCHES, H), dtype=jnp.float32)

    outs = parallel_linear(x, weights, biases)             # bf16 MXU default
    outs = [jax.block_until_ready(o) for o in outs]
    refs = [x @ weights[i] + biases[i] for i in range(N_BRANCHES)]
    for o, r in zip(outs, refs):
        assert o.shape == (B, S, H)
        assert jnp.allclose(o, r, atol=2e-2, rtol=2e-2)    # bf16 rounding

    # --- Test 2: 128-multiple hidden size (tiled path, bf16 default) --------
    B2, S2, H2 = 2, 8, 128
    kx2, kw2, kb2, key = jax.random.split(key, 4)
    x2 = jax.random.normal(kx2, (B2, S2, H2), dtype=jnp.float32)
    weights2 = 0.05 * jax.random.normal(kw2, (N_BRANCHES, H2, H2), dtype=jnp.float32)
    biases2 = 0.01 * jax.random.normal(kb2, (N_BRANCHES, H2), dtype=jnp.float32)

    outs2 = parallel_linear(x2, weights2, biases2)
    outs2 = [jax.block_until_ready(o) for o in outs2]
    refs2 = [x2 @ weights2[i] + biases2[i] for i in range(N_BRANCHES)]
    for o, r in zip(outs2, refs2):
        assert o.shape == (B2, S2, H2)
        assert jnp.allclose(o, r, atol=2e-2, rtol=2e-2)    # bf16 rounding

    # --- Test 3: exact f32 compute + row padding (M = 15, not a tile mult) --
    B3, S3, H3 = 3, 5, 128
    kx3, key = jax.random.split(key, 2)
    x3 = jax.random.normal(kx3, (B3, S3, H3), dtype=jnp.float32)

    outs3 = parallel_linear(x3, weights2, biases2, compute_dtype=jnp.float32)
    outs3 = [jax.block_until_ready(o) for o in outs3]
    refs3 = [x3 @ weights2[i] + biases2[i] for i in range(N_BRANCHES)]
    for o, r in zip(outs3, refs3):
        assert o.shape == (B3, S3, H3)
        assert jnp.allclose(o, r, atol=1e-4, rtol=1e-4)

    print("KERNEL_OK")
</pallas_src>

<mosaic_0001>
module attributes {stable_mosaic.version = 11 : i64} {
  func.func @_fused_kernel(%arg0: i32, %arg1: memref<16x32xbf16, #tpu.memory_space<vmem>>, %arg2: memref<32x128xbf16, #tpu.memory_space<vmem>>, %arg3: memref<1x128xf32, #tpu.memory_space<vmem>>, %arg4: memref<16x128xf32, #tpu.memory_space<vmem>>) attributes {dimension_semantics = [#tpu.dimension_semantics<parallel>], iteration_bounds = array<i64: 1>, scalar_prefetch = 0 : i64, scratch_operands = 0 : i64, tpu.core_type = #tpu.core_type<tc>, window_params = [{transform_indices = @transform_0, window_bounds = array<i64: 16, 32>}, {pipeline_mode = #tpu.pipeline_mode<synchronous>, transform_indices = @transform_1, window_bounds = array<i64: 32, 128>}, {pipeline_mode = #tpu.pipeline_mode<synchronous>, transform_indices = @transform_2, window_bounds = array<i64: 1, 128>}, {transform_indices = @transform_3, window_bounds = array<i64: 16, 128>}]} {
    %c0 = arith.constant 0 : index
    %c0_0 = arith.constant 0 : index
    %0 = vector.load %arg1[%c0, %c0_0] : memref<16x32xbf16, #tpu.memory_space<vmem>>, vector<16x32xbf16>
    %c0_1 = arith.constant 0 : index
    %c0_2 = arith.constant 0 : index
    %1 = vector.load %arg2[%c0_1, %c0_2] : memref<32x128xbf16, #tpu.memory_space<vmem>>, vector<32x128xbf16>
    %cst = arith.constant dense<0.000000e+00> : vector<16x128xf32>
    %2 = tpu.matmul %0, %1, %cst {dimension_numbers = #tpu.dot_dimension_numbers<[1], [0], [0], [1], [0, 0, 1, 1], [], []>} : vector<16x32xbf16>, vector<32x128xbf16>, vector<16x128xf32> -> vector<16x128xf32>
    %c0_3 = arith.constant 0 : index
    %c0_4 = arith.constant 0 : index
    %3 = vector.load %arg3[%c0_3, %c0_4] : memref<1x128xf32, #tpu.memory_space<vmem>>, vector<1x128xf32>
    %4 = vector.broadcast %3 : vector<1x128xf32> to vector<16x128xf32>
    %5 = arith.addf %2, %4 : vector<16x128xf32>
    %c0_5 = arith.constant 0 : index
    %c0_6 = arith.constant 0 : index
    %6 = vector.load %arg4[%c0_5, %c0_6] : memref<16x128xf32, #tpu.memory_space<vmem>>, vector<16x128xf32>
    tpu.vector_store %arg4[%c0_5, %c0_6], %5 {strides = array<i32>} : memref<16x128xf32, #tpu.memory_space<vmem>>, vector<16x128xf32>,
    return
  }
  func.func @transform_0(%arg0: i32) -> (i32, i32) {
    %c0_i32 = arith.constant 0 : i32
    %c0_i32_0 = arith.constant 0 : i32
    return %arg0, %c0_i32 : i32, i32
  }
  func.func @transform_1(%arg0: i32) -> (i32, i32) {
    %c0_i32 = arith.constant 0 : i32
    %c0_i32_0 = arith.constant 0 : i32
    %c0_i32_1 = arith.constant 0 : i32
    return %c0_i32, %c0_i32_0 : i32, i32
  }
  func.func @transform_2(%arg0: i32) -> (i32, i32) {
    %c0_i32 = arith.constant 0 : i32
    %c0_i32_0 = arith.constant 0 : i32
    %c0_i32_1 = arith.constant 0 : i32
    return %c0_i32, %c0_i32_0 : i32, i32
  }
  func.func @transform_3(%arg0: i32) -> (i32, i32) {
    %c0_i32 = arith.constant 0 : i32
    %c0_i32_0 = arith.constant 0 : i32
    return %arg0, %c0_i32 : i32, i32
  }
}

</mosaic_0001>

<llo_original>
// kernel: parallel_linear.1
$region0: #{parallel_linear.1}
  #allocation0 [shape = 'u32[]', space=smem, size = 0x4, offset = 0x4, fixed_abs, tag = 'smem constant byte address 0x4 - core index']
  #allocation1 [shape = 'u32[144,128]{1,0:T(1,128)}', space=vmem, size = 0x12000, scoped, tag = 'internal scratch']
  %s0 = inlined_call_operand.vmem [shape: bf16[16,32], index: 0, kind: input, shape index: {}]
  %s1 = inlined_call_operand.vmem [shape: bf16[32,128], index: 1, kind: input, shape index: {}]
  %s2 = inlined_call_operand.vmem [shape: f32[1,128], index: 2, kind: input, shape index: {}]
  %s3 = inlined_call_operand.vmem [shape: f32[16,128], index: 3, kind: output, shape index: {}]
  %s4 = sld [smem:[#allocation0]]
  $region22: #{parallel_linear.1} parent=0
    _
  %s6 = ssub.s32 1, %s4
  %s7 = scalar_select 0, %s6, %s4
  // Predicated region
  $region2: #{parallel_linear.1} parent=0 // pred_check
    _
  $region3: #{parallel_linear.1} parent=0 // pred_check_branch
    %9 = sbr.rel (0) target = $region5
  $region4: #{parallel_linear.1} parent=0 // pred_region
    _
  $region5: #{parallel_linear.1} parent=0 // pred_fallthru
    _
  // Predicated region
  $region6: #{parallel_linear.1} parent=0 // pred_check
    _
  $region7: #{parallel_linear.1} parent=0 // pred_check_branch
    %11 = sbr.rel (0) target = $region9
  $region8: #{parallel_linear.1} parent=0 // pred_region
    _
  $region9: #{parallel_linear.1} parent=0 // pred_fallthru
    _
  // Predicated region
  $region10: #{parallel_linear.1} parent=0 // pred_check
    _
  $region11: #{parallel_linear.1} parent=0 // pred_check_branch
    %13 = sbr.rel (0) target = $region13
  $region12: #{parallel_linear.1} parent=0 // pred_region
    _
  $region13: #{parallel_linear.1} parent=0 // pred_fallthru
    _
  %v15 = vld [vmem:[%s0] sm:$0xf]
  %v16 = vld [vmem:[%s0 + $0x4] sm:$0xf]
  %v17 = vld [vmem:[%s1] sm:$0xf]
  %v18 = vld [vmem:[%s1 + $0x4] sm:$0xf]
  %v19 = vld [vmem:[%s1 + $0x8] sm:$0xf]
  %v20 = vld [vmem:[%s1 + $0xc] sm:$0xf]
  %v21 = vld [vmem:[%s2] sm:$0x1]
  %v23 = vlaneseq
  %v24 = vshrl.u32 %v23, 7
  %v25 = vsub.s32 0, %v24
  %v26 = vrot.slane %v21, %v25
  %v30 = vunpack.c.l.b16 %v15
  %v31 = vunpack.c.l.b16 %v16
  %v32 = vpack.c.b16 %v31, %v30
  %v37 = vunpack.c.l.b16 %v17
  %v38 = vunpack.c.l.b16 %v18
  %v39 = vunpack.c.l.b16 %v19
  %v40 = vunpack.c.l.b16 %v20
  %v41 = vpack.c.b16 %v38, %v37
  %v42 = vpack.c.b16 %v40, %v39
  %vm45 = vcmask 261120
  %v47 = vsel %vm45, %v32, 0
  %49 = vmatprep.subr.bf16.mxu0 0
  %50 = vmatpush1.bf16.msra.mxu0 %v41
  %51 = vmatprep.subr.bf16.mxu0 0
  %52 = vmatpush1.bf16.msra.mxu0 %v42
  %53 = vmatprep.subr.bf16.mxu0 0
  %54 = vmatpush1.bf16.msra.mxu0 0
  %55 = vmatprep.subr.bf16.mxu0 0
  %56 = vmatpush1.bf16.msra.mxu0 0
  %57 = vmatprep.subr.bf16.mxu0 0
  %58 = vmatpush1.bf16.msra.mxu0 0
  %59 = vmatprep.subr.bf16.mxu0 0
  %60 = vmatpush1.bf16.msra.mxu0 0
  %61 = vmatprep.subr.bf16.mxu0 0
  %62 = vmatpush1.bf16.msra.mxu0 0
  %63 = vmatprep.subr.bf16.mxu0 0
  %64 = vmatpush1.bf16.msra.mxu0 0
  %65 = vmatprep.subr.bf16.mxu0 0
  %66 = vmatpush1.bf16.msra.mxu0 0
  %67 = vmatprep.subr.bf16.mxu0 0
  %68 = vmatpush1.bf16.msra.mxu0 0
  %69 = vmatprep.subr.bf16.mxu0 0
  %70 = vmatpush1.bf16.msra.mxu0 0
  %71 = vmatprep.subr.bf16.mxu0 0
  %72 = vmatpush1.bf16.msra.mxu0 0
  %73 = vmatprep.subr.bf16.mxu0 0
  %74 = vmatpush1.bf16.msra.mxu0 0
  %75 = vmatprep.subr.bf16.mxu0 0
  %76 = vmatpush1.bf16.msra.mxu0 0
  %77 = vmatprep.subr.bf16.mxu0 0
  %78 = vmatpush1.bf16.msra.mxu0 0
  %79 = vmatprep.subr.bf16.mxu0 0
  %80 = vmatpush1.bf16.msra.mxu0 0
  %81 = vmatprep.mubr.bf16.mxu0 0
  %82 = vmatmul.mubr.bf16.gmra.mrb[0].mxu0 %v47
  %v83 = vpop.f32.mrb[0].mxu0
  %v84 = vadd.f32 %v26, %v83
  %v85 = vpop.f32.mrb[0].mxu0
  %v86 = vpop.f32.mrb[0].mxu0
  %v87 = vadd.f32 %v26, %v86
  %v88 = vpop.f32.mrb[0].mxu0
  %89 = vdwg.mxu0
  %90 = vst [vmem:[%s3] sm:$0xff] %v84
  %91 = vst [vmem:[%s3 + $0x8] sm:$0xff] %v87
  // Predicated region
  $region14: #{parallel_linear.1} parent=0 // pred_check
    _
  $region15: #{parallel_linear.1} parent=0 // pred_check_branch
    %93 = sbr.rel (0) target = $region17
  $region16: #{parallel_linear.1} parent=0 // pred_region
    _
  $region17: #{parallel_linear.1} parent=0 // pred_fallthru
    _
  // Predicated region
  $region18: #{parallel_linear.1} parent=0 // pred_check
    _
  $region19: #{parallel_linear.1} parent=0 // pred_check_branch
    %95 = sbr.rel (0) target = $region21
  $region20: #{parallel_linear.1} parent=0 // pred_region
    _
  $region21: #{parallel_linear.1} parent=0 // pred_fallthru
    _

</llo_original>
